<compile_context>
chip_gen: v7x
topology: tpu7x:2x2x1
jax: 0.10.0
libtpu: 0.0.40
codegen_flags: <defaults>
</compile_context>

<pallas_src>
import functools

import jax
import jax.numpy as jnp
from jax.experimental import pallas as pl
from jax.experimental.pallas import tpu as pltpu


_DEFAULT_VMEM_BYTES = 64 * 1024 * 1024   # conservative fallback = v7x physical VMEM


def _vmem_capacity_bytes():
    """Generation-aware physical VMEM (v5e/v6e: 128 MiB, v7x: 64 MiB per TC)."""
    try:
        cap = int(pltpu.get_tpu_info().vmem_capacity_bytes)
        if cap > 0:
            return cap
    except Exception:
        pass
    return _DEFAULT_VMEM_BYTES


def _largest_tile(S, max_rows):
    """Largest multiple-of-8 divisor of S that is <= max_rows (requires S % 8 == 0)."""
    tile = min(S, max(8, (max_rows // 8) * 8))
    tile = max(8, (tile // 8) * 8)
    while S % tile != 0:
        tile -= 8
    return max(tile, 8)


# ---------------------------------------------------------------------------
# Fused single-pass kernel: grid=(B,), whole (1, S, D) slab per step.
# ---------------------------------------------------------------------------
def _fused_norm_kernel(x_ref, gamma_ref, beta_ref, o_ref, *, eps, d_model):
    x = x_ref[...].astype(jnp.float32)                  # (1, S, D)
    mean_seq = jnp.mean(x, axis=1, keepdims=True)       # (1, 1, D)  mean over dim=1

    # Unbiased (ddof=1) std over the last dim — matches torch.std default.
    # NOTE: divides by (d_model - 1); d_model == 1 gives nan exactly as torch does.
    mu = jnp.mean(x, axis=-1, keepdims=True)            # (1, S, 1)
    c = x - mu
    var = jnp.sum(c * c, axis=-1, keepdims=True) * (1.0 / (d_model - 1))
    inv = 1.0 / (jnp.sqrt(var) + eps)                   # exact; only (S, 1) elements
    y = (x - mean_seq) * inv                            # (1, S, D)

    gamma = gamma_ref[...].astype(jnp.float32)          # (1, D) -> broadcast over rows
    beta = beta_ref[...].astype(jnp.float32)            # (1, D)
    o_ref[...] = (gamma * y + beta).astype(o_ref.dtype)


# ---------------------------------------------------------------------------
# Streaming two-pass fallback.
# ---------------------------------------------------------------------------
def _seq_mean_kernel(x_ref, mean_ref, *, inv_s):
    # Pass 1: accumulate the seq-axis sum DIRECTLY into the resident output
    # block (same block index across the s axis), finalize to the mean.
    s = pl.program_id(1)

    @pl.when(s == 0)
    def _():
        mean_ref[...] = jnp.zeros_like(mean_ref)

    mean_ref[...] += jnp.sum(x_ref[...].astype(jnp.float32), axis=1, keepdims=True)

    @pl.when(s == pl.num_programs(1) - 1)
    def _():
        mean_ref[...] = mean_ref[...] * inv_s


def _norm_kernel(x_ref, mean_ref, gamma_ref, beta_ref, o_ref, *, eps, d_model):
    # Pass 2: x block (1, TILE_S, D); seq-mean block (1, 1, D); gamma/beta (1, D).
    x = x_ref[...].astype(jnp.float32)                  # (1, TS, D)
    mean_seq = mean_ref[...]                            # (1, 1, D)  f32

    mu = jnp.mean(x, axis=-1, keepdims=True)            # (1, TS, 1)
    c = x - mu
    var = jnp.sum(c * c, axis=-1, keepdims=True) * (1.0 / (d_model - 1))
    inv = 1.0 / (jnp.sqrt(var) + eps)                   # exact divide on (TS, 1) only
    y = (x - mean_seq) * inv                            # (1, TS, D)

    gamma = gamma_ref[...].astype(jnp.float32)          # (1, D)
    beta = beta_ref[...].astype(jnp.float32)            # (1, D)
    o_ref[...] = (gamma * y + beta).astype(o_ref.dtype)


# ---------------------------------------------------------------------------
# Wrapper
# ---------------------------------------------------------------------------
def normalization_layer(x, gamma, beta, epsilon=1e-5, *,
                        force_two_pass=False, tile_s=None):
    """x: (B, S, D); gamma/beta: (D,). Returns gamma*(x - mean_seq)/(std_D + eps) + beta."""
    B, S, D = x.shape
    in_bytes = jnp.dtype(x.dtype).itemsize
    out_bytes = jnp.dtype(x.dtype).itemsize

    # Generation-aware VMEM budget (v7x: 64 MiB -> ~56 MiB limit; v5e/v6e: 128 -> 112 MiB).
    vmem_cap = _vmem_capacity_bytes()
    vmem_limit = int(vmem_cap * 7 // 8)
    usable = int(vmem_limit * 0.9)      # headroom for compiler scratch / pipeline state

    gamma2d = gamma.reshape(1, D).astype(jnp.float32)
    beta2d = beta.reshape(1, D).astype(jnp.float32)
    # TODO(synk): for d_model not a multiple of 128, pad the last dim so output
    # stores stay lane-dense (full-extent blocks are still correct, just masked).

    # ---- path selection ------------------------------------------------------
    # Fused slab cost: double-buffered input + output slabs plus ~2 f32 temps.
    slab_need = S * D * (2 * in_bytes + 2 * out_bytes + 2 * 4)
    fused_fits = slab_need <= usable
    can_tile_s = (S % 8 == 0) and (S >= 16)

    if force_two_pass:
        use_fused = False
    elif not can_tile_s:
        # S cannot be split into valid (multiple-of-8) tiles, so full-S blocks
        # are mandatory either way; the fused single pass moves the least data.
        use_fused = True
    else:
        # Fused halves HBM traffic (2x vs 3x of B*S*D); with B == 1 prefer the
        # streaming path so the parallel S tiles can feed both v7x TensorCores.
        use_fused = fused_fits and B >= 2

    if use_fused:
        return pl.pallas_call(
            functools.partial(_fused_norm_kernel, eps=epsilon, d_model=D),
            out_shape=jax.ShapeDtypeStruct((B, S, D), x.dtype),
            grid=(B,),
            in_specs=[
                pl.BlockSpec((1, S, D), lambda b: (b, 0, 0)),   # x slab
                pl.BlockSpec((1, D), lambda b: (0, 0)),         # gamma (shared)
                pl.BlockSpec((1, D), lambda b: (0, 0)),         # beta  (shared)
            ],
            out_specs=pl.BlockSpec((1, S, D), lambda b: (b, 0, 0)),
            compiler_params=pltpu.CompilerParams(
                dimension_semantics=("parallel",),
                vmem_limit_bytes=vmem_limit,
            ),
        )(x, gamma2d, beta2d)

    # ---- streaming two-pass fallback ----------------------------------------
    # Pass-1 tile: only the input tile is double-buffered (output is (1,1,D)),
    # so it can use a larger S tile than Pass 2.
    max_rows_1 = max(8, usable // max(1, 2 * D * in_bytes))
    # Pass-2 tile: double-buffered in + out tiles plus ~2 f32 temporaries.
    per_row_2 = D * (2 * in_bytes + 2 * out_bytes + 2 * 4)
    max_rows_2 = max(8, usable // max(1, per_row_2))

    if can_tile_s:
        tile_s1 = tile_s if tile_s is not None else _largest_tile(S, max_rows_1)
        tile_s2 = tile_s if tile_s is not None else _largest_tile(S, max_rows_2)
    else:
        tile_s1 = tile_s2 = S
    assert S % tile_s1 == 0 and S % tile_s2 == 0, "tile_s must divide S"

    # Pass 1: sequence-axis mean, (B, 1, D) in f32, accumulated in the output block.
    seq_mean = pl.pallas_call(
        functools.partial(_seq_mean_kernel, inv_s=1.0 / S),
        out_shape=jax.ShapeDtypeStruct((B, 1, D), jnp.float32),
        grid=(B, S // tile_s1),
        in_specs=[pl.BlockSpec((1, tile_s1, D), lambda b, s: (b, s, 0))],
        out_specs=pl.BlockSpec((1, 1, D), lambda b, s: (b, 0, 0)),
        compiler_params=pltpu.CompilerParams(
            dimension_semantics=("parallel", "arbitrary"),
            vmem_limit_bytes=vmem_limit,
        ),
    )(x)

    # Pass 2: streaming normalize + affine; both grid axes independent.
    out = pl.pallas_call(
        functools.partial(_norm_kernel, eps=epsilon, d_model=D),
        out_shape=jax.ShapeDtypeStruct((B, S, D), x.dtype),
        grid=(B, S // tile_s2),
        in_specs=[
            pl.BlockSpec((1, tile_s2, D), lambda b, s: (b, s, 0)),   # x tile
            pl.BlockSpec((1, 1, D), lambda b, s: (b, 0, 0)),         # seq mean
            pl.BlockSpec((1, D), lambda b, s: (0, 0)),               # gamma (shared)
            pl.BlockSpec((1, D), lambda b, s: (0, 0)),               # beta  (shared)
        ],
        out_specs=pl.BlockSpec((1, tile_s2, D), lambda b, s: (b, s, 0)),
        compiler_params=pltpu.CompilerParams(
            dimension_semantics=("parallel", "parallel"),
            vmem_limit_bytes=vmem_limit,
        ),
    )(x, seq_mean, gamma2d, beta2d)
    return out


def _reference(x, gamma, beta, epsilon=1e-5):
    mean = jnp.mean(x, axis=1, keepdims=True)
    std = jnp.std(x, axis=-1, keepdims=True, ddof=1)
    y = (x - mean) / (std + epsilon)
    return gamma * y + beta


if __name__ == "__main__":
    # Small shapes consistent with the module (module default d_model=512).
    # D=128 keeps the lane axis a full multiple of 128; S=16 lets the forced
    # two-pass run exercise multi-tile accumulation and the (B, S_tiles) grid.
    B, S, D = 2, 16, 128
    key = jax.random.PRNGKey(0)
    x = jax.random.normal(key, (B, S, D), dtype=jnp.float32)

    # Deterministic parameter init exactly as the module's __init__:
    gamma = jnp.ones((D,), dtype=jnp.float32)
    beta = jnp.zeros((D,), dtype=jnp.float32)

    ref = _reference(x, gamma, beta, epsilon=1e-5)

    # Primary fused single-pass path (auto-selected: slab fits, B >= 2).
    out_fused = jax.block_until_ready(
        normalization_layer(x, gamma, beta, epsilon=1e-5))
    # Streaming two-pass fallback path with small forced tiles (grid=(B, 2)).
    out_stream = jax.block_until_ready(
        normalization_layer(x, gamma, beta, epsilon=1e-5,
                            force_two_pass=True, tile_s=8))

    for out in (out_fused, out_stream):
        assert out.shape == (B, S, D)
        # Exact reciprocal restored -> tight tolerance again.
        assert jnp.allclose(out, ref, atol=3e-5, rtol=3e-5), "mismatch vs JAX reference"

    print("KERNEL_OK")
</pallas_src>

<mosaic_0001>
module attributes {stable_mosaic.version = 11 : i64} {
  func.func @_fused_norm_kernel(%arg0: i32, %arg1: memref<1x16x128xf32, #tpu.memory_space<vmem>>, %arg2: memref<1x128xf32, #tpu.memory_space<vmem>>, %arg3: memref<1x128xf32, #tpu.memory_space<vmem>>, %arg4: memref<1x16x128xf32, #tpu.memory_space<vmem>>) attributes {dimension_semantics = [#tpu.dimension_semantics<parallel>], iteration_bounds = array<i64: 2>, scalar_prefetch = 0 : i64, scratch_operands = 0 : i64, tpu.core_type = #tpu.core_type<tc>, window_params = [{transform_indices = @transform_0, window_bounds = array<i64: 1, 16, 128>}, {pipeline_mode = #tpu.pipeline_mode<synchronous>, transform_indices = @transform_1, window_bounds = array<i64: 1, 128>}, {pipeline_mode = #tpu.pipeline_mode<synchronous>, transform_indices = @transform_2, window_bounds = array<i64: 1, 128>}, {transform_indices = @transform_3, window_bounds = array<i64: 1, 16, 128>}]} {
    %c0 = arith.constant 0 : index
    %c0_0 = arith.constant 0 : index
    %c0_1 = arith.constant 0 : index
    %0 = vector.load %arg1[%c0, %c0_0, %c0_1] : memref<1x16x128xf32, #tpu.memory_space<vmem>>, vector<1x16x128xf32>
    %cst = arith.constant dense<0.000000e+00> : vector<1x128xf32>
    %1 = vector.multi_reduction <add>, %0, %cst [1] : vector<1x16x128xf32> to vector<1x128xf32>
    %2 = vector.shape_cast %1 : vector<1x128xf32> to vector<1x1x128xf32>
    %cst_2 = arith.constant 1.600000e+01 : f32
    %3 = vector.broadcast %cst_2 : f32 to vector<1x1x128xf32>
    %4 = arith.divf %2, %3 : vector<1x1x128xf32>
    %cst_3 = arith.constant dense<0.000000e+00> : vector<1x16xf32>
    %5 = vector.multi_reduction <add>, %0, %cst_3 [2] : vector<1x16x128xf32> to vector<1x16xf32>
    %6 = vector.shape_cast %5 : vector<1x16xf32> to vector<1x16x1xf32>
    %cst_4 = arith.constant 1.280000e+02 : f32
    %7 = vector.broadcast %cst_4 : f32 to vector<1x16x1xf32>
    %8 = arith.divf %6, %7 : vector<1x16x1xf32>
    %9 = vector.broadcast %8 : vector<1x16x1xf32> to vector<1x16x128xf32>
    %10 = arith.subf %0, %9 : vector<1x16x128xf32>
    %11 = arith.mulf %10, %10 : vector<1x16x128xf32>
    %cst_5 = arith.constant dense<0.000000e+00> : vector<1x16xf32>
    %12 = vector.multi_reduction <add>, %11, %cst_5 [2] : vector<1x16x128xf32> to vector<1x16xf32>
    %13 = vector.shape_cast %12 : vector<1x16xf32> to vector<1x16x1xf32>
    %cst_6 = arith.constant 0.00787401571 : f32
    %14 = vector.broadcast %cst_6 : f32 to vector<1x16x1xf32>
    %15 = arith.mulf %13, %14 : vector<1x16x1xf32>
    %16 = math.sqrt %15 : vector<1x16x1xf32>
    %cst_7 = arith.constant 9.99999974E-6 : f32
    %17 = vector.broadcast %cst_7 : f32 to vector<1x16x1xf32>
    %18 = arith.addf %16, %17 : vector<1x16x1xf32>
    %cst_8 = arith.constant 1.000000e+00 : f32
    %19 = vector.broadcast %cst_8 : f32 to vector<1x16x1xf32>
    %20 = arith.divf %19, %18 : vector<1x16x1xf32>
    %21 = vector.broadcast %4 : vector<1x1x128xf32> to vector<1x16x128xf32>
    %22 = arith.subf %0, %21 : vector<1x16x128xf32>
    %23 = vector.broadcast %20 : vector<1x16x1xf32> to vector<1x16x128xf32>
    %24 = arith.mulf %22, %23 : vector<1x16x128xf32>
    %c0_9 = arith.constant 0 : index
    %c0_10 = arith.constant 0 : index
    %25 = vector.load %arg2[%c0_9, %c0_10] : memref<1x128xf32, #tpu.memory_space<vmem>>, vector<1x128xf32>
    %c0_11 = arith.constant 0 : index
    %c0_12 = arith.constant 0 : index
    %26 = vector.load %arg3[%c0_11, %c0_12] : memref<1x128xf32, #tpu.memory_space<vmem>>, vector<1x128xf32>
    %27 = vector.shape_cast %25 : vector<1x128xf32> to vector<1x1x128xf32>
    %28 = vector.broadcast %27 : vector<1x1x128xf32> to vector<1x16x128xf32>
    %29 = arith.mulf %28, %24 : vector<1x16x128xf32>
    %30 = vector.shape_cast %26 : vector<1x128xf32> to vector<1x1x128xf32>
    %31 = vector.broadcast %30 : vector<1x1x128xf32> to vector<1x16x128xf32>
    %32 = arith.addf %29, %31 : vector<1x16x128xf32>
    %c0_13 = arith.constant 0 : index
    %c0_14 = arith.constant 0 : index
    %c0_15 = arith.constant 0 : index
    %33 = vector.load %arg4[%c0_13, %c0_14, %c0_15] : memref<1x16x128xf32, #tpu.memory_space<vmem>>, vector<1x16x128xf32>
    tpu.vector_store %arg4[%c0_13, %c0_14, %c0_15], %32 {strides = array<i32>} : memref<1x16x128xf32, #tpu.memory_space<vmem>>, vector<1x16x128xf32>,
    return
  }
  func.func @transform_0(%arg0: i32) -> (i32, i32, i32) {
    %c0_i32 = arith.constant 0 : i32
    %c0_i32_0 = arith.constant 0 : i32
    %c0_i32_1 = arith.constant 0 : i32
    return %arg0, %c0_i32, %c0_i32_0 : i32, i32, i32
  }
  func.func @transform_1(%arg0: i32) -> (i32, i32) {
    %c0_i32 = arith.constant 0 : i32
    %c0_i32_0 = arith.constant 0 : i32
    %c0_i32_1 = arith.constant 0 : i32
    return %c0_i32, %c0_i32_0 : i32, i32
  }
  func.func @transform_2(%arg0: i32) -> (i32, i32) {
    %c0_i32 = arith.constant 0 : i32
    %c0_i32_0 = arith.constant 0 : i32
    %c0_i32_1 = arith.constant 0 : i32
    return %c0_i32, %c0_i32_0 : i32, i32
  }
  func.func @transform_3(%arg0: i32) -> (i32, i32, i32) {
    %c0_i32 = arith.constant 0 : i32
    %c0_i32_0 = arith.constant 0 : i32
    %c0_i32_1 = arith.constant 0 : i32
    return %arg0, %c0_i32, %c0_i32_0 : i32, i32, i32
  }
}

</mosaic_0001>

<llo_original>
// kernel: tpu_custom_call.1
$region0: #{tpu_custom_call.1}
  #allocation0 [shape = 'u32[]', space=smem, size = 0x4, offset = 0x4, fixed_abs, tag = 'smem constant byte address 0x4 - core index']
  #allocation1 [shape = 'u32[144,128]{1,0:T(1,128)}', space=vmem, size = 0x12000, scoped, tag = 'internal scratch']
  %s0 = inlined_call_operand.hbm [shape: f32[2,16,128], index: 0, kind: input, shape index: {}]
  %s1 = inlined_call_operand.vmem [shape: f32[1,128], index: 1, kind: input, shape index: {}]
  %s2 = inlined_call_operand.vmem [shape: f32[1,128], index: 2, kind: input, shape index: {}]
  %s3 = inlined_call_operand.hbm [shape: f32[2,16,128], index: 3, kind: output, shape index: {}]
  %s4 = sld [smem:[#allocation0]]
  $region49: #{tpu_custom_call.1} parent=0
    _
  %s6 = ssub.s32 1, %s4
  %s7 = scalar_select 0, %s6, %s4
  $region1: #{tpu_custom_call.1} parent=0
    #allocation2 [shape = 'u8[16384]{0}', space=vmem, size = 0x4000, scoped, tag = 'input window, operand 0']
    #allocation3 [shape = 's32[2]{0}', space=sflag, size = 0x8, scoped, tag = 'scoped memory for tpu_custom_call.1']
    #allocation4 [shape = 's32[2]{0}', space=sflag, size = 0x8, scoped, tag = 'scoped memory for tpu_custom_call.1']
    #allocation5 [shape = 'u8[16384]{0}', space=vmem, size = 0x4000, scoped, tag = 'output window, operand 0']
    %8 = vsyncpa [#allocation3], 0
    %s9 = scalar_lea.sflag [#allocation3], 1
    %10 = vsyncpa %s9, 0
    %11 = vsyncpa [#allocation4], 0
    %s12 = scalar_lea.sflag [#allocation4], 1
    %13 = vsyncpa %s12, 0
    loop: start=0, step=1, limit=4
    $region2: #{tpu_custom_call.1} parent=1 // loop_pre_header
      _
    $region3: #{tpu_custom_call.1} parent=1 // loop_header
      %s15 = sphi 0, %s19
      %p16 = scmp.ge.s32.totalorder %s15, 4
      %s25 = sphi 0, %s27
      %s28 = sphi 0, %s25
      %s29 = sphi 0, %s28
      %s45 = sphi 0, %s29
      %s49 = sphi 0, %s49
      %s51 = sphi 0, %s49
      %s52 = sphi 0, %s51
      %s66 = sphi 0, %s52
      %s70 = sphi 0, %s70
      %s72 = sphi 0, %s70
      %s73 = sphi 0, %s72
      %s87 = sphi 0, %s73
      %s93 = sphi 0, %s95
      %s96 = sphi 0, %s93
      %s97 = sphi 0, %s96
      %s113 = sphi 0, %s97
    $region4: #{tpu_custom_call.1} parent=1 // loop_header_branch
      %18 = sbr.rel (%p16) target = $region8
    $region5: #{tpu_custom_call.1} parent=1 // loop_body
      %s20 = ssub.s32 %s15, 1
      %s21 = ssub.s32 %s15, 2
      %s22 = sadd.s32 %s15, 1
      %s23 = ssub.s32 %s15, %s22
      %p24 = scmp.eq.s32.totalorder %s23, 0
      %s26 = sadd.s32 %s25, 1
      %s27 = scalar_select %p24, %s25, %s26
      %p30 = pneg %p24
      %p31 = scmp.eq.s32.totalorder %s15, 1
      %p32 = por %p30, %p31
      %p33 = scmp.ne.s32.totalorder %s25, %s28
      %p34 = scmp.eq.s32.totalorder %s15, 0
      %p35 = por %p33, %p34
      %p36 = scmp.ne.s32.totalorder %s25, %s28
      %p37 = scmp.eq.s32.totalorder %s20, 1
      %p38 = por %p36, %p37
      %p39 = scmp.ne.s32.totalorder %s28, %s29
      %p40 = scmp.eq.s32.totalorder %s20, 0
      %p41 = por %p39, %p40
      %p42 = scmp.ne.s32.totalorder %s28, %s29
      %p43 = scmp.eq.s32.totalorder %s21, 1
      %p44 = por %p42, %p43
      %p46 = scmp.ne.s32.totalorder %s29, %s45
      %p47 = scmp.eq.s32.totalorder %s21, 0
      %p48 = por %p46, %p47
      %s50 = sadd.s32 %s49, 1
      %p53 = scmp.eq.s32.totalorder %s15, 1
      %p54 = scmp.ne.s32.totalorder %s49, %s51
      %p55 = scmp.eq.s32.totalorder %s15, 0
      %p56 = por %p54, %p55
      %p57 = scmp.ne.s32.totalorder %s49, %s51
      %p58 = scmp.eq.s32.totalorder %s20, 1
      %p59 = por %p57, %p58
      %p60 = scmp.ne.s32.totalorder %s51, %s52
      %p61 = scmp.eq.s32.totalorder %s20, 0
      %p62 = por %p60, %p61
      %p63 = scmp.ne.s32.totalorder %s51, %s52
      %p64 = scmp.eq.s32.totalorder %s21, 1
      %p65 = por %p63, %p64
      %p67 = scmp.ne.s32.totalorder %s52, %s66
      %p68 = scmp.eq.s32.totalorder %s21, 0
      %p69 = por %p67, %p68
      %s71 = sadd.s32 %s70, 1
      %p74 = scmp.eq.s32.totalorder %s15, 1
      %p75 = scmp.ne.s32.totalorder %s70, %s72
      %p76 = scmp.eq.s32.totalorder %s15, 0
      %p77 = por %p75, %p76
      %p78 = scmp.ne.s32.totalorder %s70, %s72
      %p79 = scmp.eq.s32.totalorder %s20, 1
      %p80 = por %p78, %p79
      %p81 = scmp.ne.s32.totalorder %s72, %s73
      %p82 = scmp.eq.s32.totalorder %s20, 0
      %p83 = por %p81, %p82
      %p84 = scmp.ne.s32.totalorder %s72, %s73
      %p85 = scmp.eq.s32.totalorder %s21, 1
      %p86 = por %p84, %p85
      %p88 = scmp.ne.s32.totalorder %s73, %s87
      %p89 = scmp.eq.s32.totalorder %s21, 0
      %p90 = por %p88, %p89
      %s91 = ssub.s32 %s15, %s22
      %p92 = scmp.eq.s32.totalorder %s91, 0
      %s94 = sadd.s32 %s93, 1
      %s95 = scalar_select %p92, %s93, %s94
      %p98 = pneg %p92
      %p99 = scmp.eq.s32.totalorder %s15, 1
      %p100 = por %p98, %p99
      %p101 = scmp.ne.s32.totalorder %s93, %s96
      %p102 = scmp.eq.s32.totalorder %s15, 0
      %p103 = por %p101, %p102
      %p104 = scmp.ne.s32.totalorder %s93, %s96
      %p105 = scmp.eq.s32.totalorder %s20, 1
      %p106 = por %p104, %p105
      %p107 = scmp.ne.s32.totalorder %s96, %s97
      %p108 = scmp.eq.s32.totalorder %s20, 0
      %p109 = por %p107, %p108
      %p110 = scmp.ne.s32.totalorder %s96, %s97
      %p111 = scmp.eq.s32.totalorder %s21, 1
      %p112 = por %p110, %p111
      %p114 = scmp.ne.s32.totalorder %s97, %s113
      %p115 = scmp.eq.s32.totalorder %s21, 0
      %p116 = por %p114, %p115
      %p117 = scmp.le.s32.totalorder 1, %s15
      %p118 = scmp.lt.s32.totalorder %s15, 3
      %p119 = pnand %p117, %p118
      %p120 = pneg %p119
      // Predicated region
      $region9: #{tpu_custom_call.1} parent=5 // pred_check
        _
      $region10: #{tpu_custom_call.1} parent=5 // pred_check_branch
        %122 = sbr.rel (%p119) target = $region12
      $region11: #{tpu_custom_call.1} parent=5 // pred_region
        %s123 = ssub.s32 %s15, 1
        // Predicated region
        $region13: #{tpu_custom_call.1} parent=11 // pred_check
          %p124 = pneg %p62
        $region14: #{tpu_custom_call.1} parent=11 // pred_check_branch
          %126 = sbr.rel (%p124) target = $region16
        $region15: #{tpu_custom_call.1} parent=11 // pred_region
          _
        $region16: #{tpu_custom_call.1} parent=11 // pred_fallthru
          _
        // Predicated region
        $region17: #{tpu_custom_call.1} parent=11 // pred_check
          %p127 = pneg %p83
        $region18: #{tpu_custom_call.1} parent=11 // pred_check_branch
          %129 = sbr.rel (%p127) target = $region20
        $region19: #{tpu_custom_call.1} parent=11 // pred_region
          _
        $region20: #{tpu_custom_call.1} parent=11 // pred_fallthru
          _
      $region12: #{tpu_custom_call.1} parent=5 // pred_fallthru
        _
      %p130 = scmp.lt.s32.totalorder %s15, 2
      // Predicated region
      $region21: #{tpu_custom_call.1} parent=5 // pred_check
        %p131 = pneg %p130
      $region22: #{tpu_custom_call.1} parent=5 // pred_check_branch
        %133 = sbr.rel (%p131) target = $region24
      $region23: #{tpu_custom_call.1} parent=5 // pred_region
        // Predicated region
        $region25: #{tpu_custom_call.1} parent=23 // pred_check
          %p134 = pneg %p35
        $region26: #{tpu_custom_call.1} parent=23 // pred_check_branch
          %136 = sbr.rel (%p134) target = $region28
        $region27: #{tpu_custom_call.1} parent=23 // pred_region
          %s137 = sand.u32 %s25, 1
          %s138 = scalar_lea.sflag [#allocation3], %s137
          %s139 = sand.u32 %s25, 1
          %s140 = smul.addr %s139, 16
          %s141 = scalar_lea.vmem [#allocation2], %s140
          %s143 = ssub.s32 256, 256
          %144 = vsyncadd %s138, %s143
          %s145 = smul.addr %s15, 2
          %s146 = smul.addr %s145, 128
          %s147 = scalar_lea.hbm %s0, %s146
          %s148 = sshll.u32 %s141, 4
          %s149 = int_to_ptr.vmem [resolvable:$true] %s148
          %154 = dma.hbm_to_vmem [thread:$0]  %s147, 256, %s149, %s138, 128, 128, 8
        $region28: #{tpu_custom_call.1} parent=23 // pred_fallthru
          _
      $region24: #{tpu_custom_call.1} parent=5 // pred_fallthru
        _
      %p155 = scmp.le.s32.totalorder 1, %s15
      %p156 = scmp.lt.s32.totalorder %s15, 3
      %p157 = pnand %p155, %p156
      %p158 = pneg %p157
      // Predicated region
      $region29: #{tpu_custom_call.1} parent=5 // pred_check
        _
      $region30: #{tpu_custom_call.1} parent=5 // pred_check_branch
        %160 = sbr.rel (%p157) target = $region32
      $region31: #{tpu_custom_call.1} parent=5 // pred_region
        %s161 = ssub.s32 %s15, 1
        %s162 = sand.u32 %s28, 1
        %s163 = scalar_lea.sflag [#allocation3], %s162
        %s164 = sand.u32 %s28, 1
        %s165 = smul.addr %s164, 16
        %s166 = scalar_lea.vmem [#allocation2], %s165
        // Predicated region
        $region33: #{tpu_custom_call.1} parent=31 // pred_check
          %p167 = pneg %p41
        $region34: #{tpu_custom_call.1} parent=31 // pred_check_branch
          %169 = sbr.rel (%p167) target = $region36
        $region35: #{tpu_custom_call.1} parent=31 // pred_region
          %170 = dma.done %s163, 256
        $region36: #{tpu_custom_call.1} parent=31 // pred_fallthru
          _
        %s171 = sand.u32 %s28, 1
        %s172 = scalar_lea.sflag [#allocation3], %s171
        %s173 = sand.u32 %s28, 1
        %s174 = smul.addr %s173, 16
        %s175 = scalar_lea.vmem [#allocation2], %s174
        %p176 = pneg %p41
        %p177 = pneg %p38
        %p178 = pneg %p62
        %p179 = pneg %p59
        %p180 = pneg %p83
        %p181 = pneg %p80
        %p182 = pneg %p109
        %p183 = pneg %p106
        %s184 = sand.u32 %s96, 1
        %s185 = scalar_lea.sflag [#allocation4], %s184
        %s186 = sand.u32 %s96, 1
        %s187 = smul.addr %s186, 16
        %s188 = scalar_lea.vmem [#allocation5], %s187
        %v189 = vld [vmem:[%s166] sm:$0xff]
        %v190 = vld [vmem:[%s166 + $0x8] sm:$0xff]
        %v191 = vadd.f32 %v189, %v190
        %v192 = vrot.slane %v191, 4
        %v193 = vadd.f32 %v191, %v192
        %v194 = vrot.slane %v193, 2
        %v195 = vadd.f32 %v193, %v194
        %v196 = vrot.slane %v195, 1
        %v197 = vadd.f32 %v195, %v196
        %v198 = vrcp.pop 16.0
        %v199 = vmul.f32 %v197, %v198
        %200 = vadd.xlane.f32.xlu0 %v189
        %v201 = vpop.xlane.xlu0 %200
        %202 = vadd.xlane.f32.xlu0 %v190
        %v203 = vpop.xlane.xlu0 %202
        %v204 = vrcp.pop 128.0
        %v205 = vmul.f32 %v201, %v204
        %v206 = vmul.f32 %v203, %v204
        %v207 = vsub.f32 %v189, %v205
        %v208 = vsub.f32 %v190, %v206
        %v209 = vmul.f32 %v207, %v207
        %v210 = vmul.f32 %v208, %v208
        %211 = vadd.xlane.f32.xlu0 %v209
        %v212 = vpop.xlane.xlu0 %211
        %213 = vadd.xlane.f32.xlu0 %v210
        %v214 = vpop.xlane.xlu0 %213
        %v215 = vmul.f32 %v212, 0.007874016
        %v216 = vmul.f32 %v214, 0.007874016
        %v217 = vrsqrt.pop %v215
        %v218 = vmul.f32 %v215, %v217
        %vm219 = vcmp.eq.f32.partialorder %v215, inf
        %v220 = vsel %vm219, %v215, %v218
        %vm221 = vcmp.eq.f32.partialorder %v215, 0.0
        %v222 = vand.u32 %v215, 2147483648
        %v223 = vsel %vm221, %v222, %v220
        %v224 = vrsqrt.pop %v216
        %v225 = vmul.f32 %v216, %v224
        %vm226 = vcmp.eq.f32.partialorder %v216, inf
        %v227 = vsel %vm226, %v216, %v225
        %vm228 = vcmp.eq.f32.partialorder %v216, 0.0
        %v229 = vand.u32 %v216, 2147483648
        %v230 = vsel %vm228, %v229, %v227
        %v231 = vadd.f32 %v223, 1e-05
        %v232 = vadd.f32 %v230, 1e-05
        %v233 = vrcp.pop %v231
        %v234 = vmul.f32 1.0, %v233
        %v235 = vrcp.pop %v232
        %v236 = vmul.f32 1.0, %v235
        %v237 = vsub.f32 %v189, %v199
        %v238 = vsub.f32 %v190, %v199
        %v239 = vmul.f32 %v237, %v234
        %v240 = vmul.f32 %v238, %v236
        %v241 = vld [vmem:[%s1] sm:$0x1]
        %v242 = vld [vmem:[%s2] sm:$0x1]
        %v244 = vlaneseq
        %v245 = vshrl.u32 %v244, 7
        %v246 = vsub.s32 0, %v245
        %v247 = vrot.slane %v241, %v246
        %v249 = vmul.f32 %v247, %v239
        %v250 = vmul.f32 %v247, %v240
        %v252 = vlaneseq
        %v253 = vshrl.u32 %v252, 7
        %v254 = vsub.s32 0, %v253
        %v255 = vrot.slane %v242, %v254
        %v257 = vadd.f32 %v249, %v255
        %v258 = vadd.f32 %v250, %v255
        %259 = vst [vmem:[%s188] sm:$0xff] %v257
        %260 = vst [vmem:[%s188 + $0x8] sm:$0xff] %v258
        %s261 = sand.u32 %s96, 1
        %s262 = scalar_lea.sflag [#allocation4], %s261
        %s263 = sand.u32 %s96, 1
        %s264 = smul.addr %s263, 16
        %s265 = scalar_lea.vmem [#allocation5], %s264
        // Predicated region
        $region37: #{tpu_custom_call.1} parent=31 // pred_check
          %p266 = pneg %p106
        $region38: #{tpu_custom_call.1} parent=31 // pred_check_branch
          %268 = sbr.rel (%p266) target = $region40
        $region39: #{tpu_custom_call.1} parent=31 // pred_region
          %s270 = ssub.s32 256, 256
          %271 = vsyncadd %s262, %s270
          %s272 = smul.addr %s20, 2
          %s273 = smul.addr %s272, 128
          %s274 = scalar_lea.hbm %s3, %s273
          %s275 = sshll.u32 %s265, 4
          %s276 = int_to_ptr.vmem [resolvable:$true] %s275
          %281 = dma.vmem_to_hbm [thread:$0]  %s276, 256, %s274, %s262, 128, 128, 8
        $region40: #{tpu_custom_call.1} parent=31 // pred_fallthru
          _
      $region32: #{tpu_custom_call.1} parent=5 // pred_fallthru
        _
      %p282 = scmp.le.s32.totalorder 2, %s15
      // Predicated region
      $region41: #{tpu_custom_call.1} parent=5 // pred_check
        %p283 = pneg %p282
      $region42: #{tpu_custom_call.1} parent=5 // pred_check_branch
        %285 = sbr.rel (%p283) target = $region44
      $region43: #{tpu_custom_call.1} parent=5 // pred_region
        %s286 = ssub.s32 %s15, 2
        // Predicated region
        $region45: #{tpu_custom_call.1} parent=43 // pred_check
          %p287 = pneg %p112
        $region46: #{tpu_custom_call.1} parent=43 // pred_check_branch
          %289 = sbr.rel (%p287) target = $region48
        $region47: #{tpu_custom_call.1} parent=43 // pred_region
          %s290 = sand.u32 %s97, 1
          %s291 = scalar_lea.sflag [#allocation4], %s290
          %s292 = sand.u32 %s97, 1
          %s293 = smul.addr %s292, 16
          %s294 = scalar_lea.vmem [#allocation5], %s293
          %295 = dma.done %s291, 256
        $region48: #{tpu_custom_call.1} parent=43 // pred_fallthru
          _
      $region44: #{tpu_custom_call.1} parent=5 // pred_fallthru
        _
    $region6: #{tpu_custom_call.1} parent=1 // loop_footer
      %s19 = sadd.s32 1, %s15
    $region7: #{tpu_custom_call.1} parent=1 // loop_footer_branch
      %14 = sbr.rel target = $region3
    $region8: #{tpu_custom_call.1} parent=1 // loop_exit
      _
    %296 = vsyncpa [#allocation3], 1
    %s297 = scalar_lea.sflag [#allocation3], 1
    %298 = vsyncpa %s297, 1
    %299 = vsyncpa [#allocation4], 1
    %s300 = scalar_lea.sflag [#allocation4], 1
    %301 = vsyncpa %s300, 1

</llo_original>
